<compile_context>
chip_gen: v6e
topology: v6e:2x2x1
jax: 0.10.0
libtpu: 0.0.40
codegen_flags: <defaults>
</compile_context>

<pallas_src>
import functools
import math

import jax
import jax.numpy as jnp
from jax import lax
from jax.experimental import pallas as pl
from jax.experimental.pallas import tpu as pltpu


# ------------------------------ small helpers --------------------------------


def _cdiv(a, b):
    return -(-a // b)


def _rup(v, m):
    return _cdiv(v, m) * m


def _gelu_tanh(x):
    c = 0.7978845608028654  # sqrt(2/pi)
    return 0.5 * x * (1.0 + jnp.tanh(c * (x + 0.044715 * x * x * x)))


def _geometry(length, *, scale_num, scale_stride, kernel_size, stride):
    """Per-scale 'same' pad geometry (mirrors _auto_pad_1d) folded into a single
    max-pad, plus the (phase, shift) map of every conv tap in the phase-split
    coordinates of the max-padded input."""
    pad0 = (stride - length % stride) % stride
    kss = [kernel_size + int(scale_stride * s) for s in range(scale_num)]
    for ks in kss:
        assert ks >= stride, "`kernel_size` must be >= `stride` (see _auto_pad_1d)"
    lefts = [(pad0 + ks - stride) // 2 for ks in kss]
    rights = [pad0 + ks - stride - l for ks, l in zip(kss, lefts)]
    left_max, right_max = max(lefts), max(rights)
    tap_maps, max_shift = [], 0
    for s, ks in enumerate(kss):
        d = left_max - lefts[s]
        taps = tuple(((k + d) % stride, (k + d) // stride) for k in range(ks))
        tap_maps.append(taps)
        max_shift = max(max_shift, max(q for _, q in taps))
    return dict(pad0=pad0, kss=kss, lefts=lefts, rights=rights,
                left_max=left_max, right_max=right_max,
                tap_maps=tuple(tap_maps), max_shift=max_shift,
                n_shift=max_shift + 1)


# ------------------------------- kernel --------------------------------------


def _msconv_kernel(x_ref, w_all_ref, shift_all_ref, w_proj_ref, shift_f_ref,
                   o_ref, *, stride, n_shift, tile_l, slab_w):
    # x_ref       : (1, stride, C_in, L_phase_pad)  phase de-interleaved input (bf16)
    # w_all_ref   : (scale_num*C_out, stride*n_shift*C_in)  all scales, in_proj +
    #               BN scale folded, block-zero-padded (bf16)
    # shift_all_ref: (scale_num*C_out, 1)  per-scale folded BN shifts (f32)
    # w_proj_ref  : (C_out, scale_num*C_out)  out_proj, final BN scale folded (bf16)
    # shift_f_ref : (C_out, 1)  final folded BN shift (f32)
    t = pl.program_id(1)
    col0 = pl.multiple_of(t * tile_l, tile_l)   # tile_l is a multiple of 128

    # Universal stacked operand: for every (phase p, shift q) stack the slice
    # x_ph[p, :, col0+q : col0+q+T] along sublanes -> (stride*n_shift*C_in, T).
    segs = []
    for p in range(stride):
        slab = x_ref[0, p, :, pl.ds(col0, slab_w)]       # (C_in, slab_w), aligned
        for q in range(n_shift):
            segs.append(slab[:, q:q + tile_l])
    stacked = jnp.concatenate(segs, axis=0)

    # One MXU matmul for every scale's strided conv; rows are already in the
    # torch.cat(outs, dim=1) layout.
    z = jnp.dot(w_all_ref[...], stacked,
                preferred_element_type=jnp.float32)       # (scale_num*C_out, T)
    z = z + shift_all_ref[...]                            # BN (eval), scale folded
    g = _gelu_tanh(z)                                     # f32 elementwise

    # out_proj (1x1 conv) + final BN shift.
    out = jnp.dot(w_proj_ref[...], g.astype(w_proj_ref.dtype),
                  preferred_element_type=jnp.float32)     # (C_out, T)
    o_ref[0] = (out + shift_f_ref[...]).astype(o_ref.dtype)


# --------------------------- pallas wrapper -----------------------------------


def _choose_tiling(l_out, target, n_batch):
    """Lane-dense (multiple-of-128) tile; pad/trim the tail instead of falling
    back to a non-lane-dense full-length tile.  Split into >=2 grid points when
    possible so both v7x TensorCores get work."""
    target = max(128, (target // 128) * 128)
    tl = min(target, _rup(l_out, 128))
    if n_batch * _cdiv(l_out, tl) < 2 and tl > 128:
        tl = max(128, ((tl // 2) // 128) * 128)
    return tl, _cdiv(l_out, tl)


def multi_scale_conv_block(x, prep, *, scale_num, scale_stride, kernel_size,
                           stride, tile_l=1024, compute_dtype=jnp.bfloat16,
                           out_dtype=None):
    if out_dtype is None:
        out_dtype = compute_dtype
    n, c_in, length = x.shape
    c_out = prep["shift_f"].shape[0]
    l_out = _cdiv(length, stride)

    geo = _geometry(length, scale_num=scale_num, scale_stride=scale_stride,
                    kernel_size=kernel_size, stride=stride)
    n_shift, max_shift = geo["n_shift"], geo["max_shift"]
    left_max, right_max = geo["left_max"], geo["right_max"]

    assert prep["pad0"] == geo["pad0"] and \
        prep["w_all"].shape == (scale_num * c_out, stride * n_shift * c_in), \
        "prep was built for a different length/stride geometry"

    tl, n_tiles = _choose_tiling(l_out, tile_l, n)
    l_out_pad = n_tiles * tl
    slab_w = _rup(tl + max_shift, 128)                 # lane-aligned slab width
    l_phase = _cdiv(length + left_max + right_max, stride)
    l_phase_pad = _rup(max(l_phase, (n_tiles - 1) * tl + slab_w), 128)
    # Every tile's slab read must stay inside the resident block.
    assert (n_tiles - 1) * tl + slab_w <= l_phase_pad

    # Pad once (in_proj has no bias, so padding before the folded conv is exact)
    # and de-interleave time into `stride` phases:
    #   x_ph[n, p, c, m] = x_padded[n, c, m*stride + p]
    x_pad = jnp.pad(x, ((0, 0), (0, 0),
                        (left_max, l_phase_pad * stride - length - left_max)))
    x_ph = x_pad.reshape(n, c_in, l_phase_pad, stride).transpose(0, 3, 1, 2)
    x_ph = x_ph.astype(compute_dtype)

    # --- static VMEM residency check (v7x: 64 MiB physical, 32 MiB scoped) ---
    out_bpe = jnp.dtype(out_dtype).itemsize
    x_block = stride * _rup(c_in, 16) * _rup(l_phase_pad, 128) * 2
    out_block = _rup(c_out, 8 if out_bpe == 4 else 16) * _rup(tl, 128) * out_bpe
    w_bytes = (_rup(scale_num * c_out, 16) * _rup(stride * n_shift * c_in, 128) * 2
               + _rup(c_out, 16) * _rup(scale_num * c_out, 128) * 2
               + _rup(scale_num * c_out, 8) * 128 * 4 + _rup(c_out, 8) * 128 * 4)
    vmem_est = 2 * (x_block + out_block + w_bytes)     # double-buffered
    assert vmem_est < 40 * 1024 * 1024, \
        f"estimated VMEM residency {vmem_est} B too large; lower tile_l"

    kernel = functools.partial(_msconv_kernel, stride=stride, n_shift=n_shift,
                               tile_l=tl, slab_w=slab_w)

    out = pl.pallas_call(
        kernel,
        out_shape=jax.ShapeDtypeStruct((n, c_out, l_out_pad), out_dtype),
        grid=(n, n_tiles),
        in_specs=[
            pl.BlockSpec((1, stride, c_in, l_phase_pad), lambda b, t: (b, 0, 0, 0)),
            pl.BlockSpec(prep["w_all"].shape, lambda b, t: (0, 0)),
            pl.BlockSpec(prep["shift_all"].shape, lambda b, t: (0, 0)),
            pl.BlockSpec(prep["w_proj"].shape, lambda b, t: (0, 0)),
            pl.BlockSpec(prep["shift_f"].shape, lambda b, t: (0, 0)),
        ],
        out_specs=pl.BlockSpec((1, c_out, tl), lambda b, t: (b, 0, t)),
        compiler_params=pltpu.CompilerParams(
            dimension_semantics=("parallel", "parallel"),
            vmem_limit_bytes=48 * 1024 * 1024),
    )(x_ph, prep["w_all"], prep["shift_all"], prep["w_proj"], prep["shift_f"])

    if l_out_pad != l_out:
        out = out[:, :, :l_out]
    return out


# ------------------------- parameters (raw + prepared) ------------------------


def _rand_bn(keys, dim):
    k1, k2, k3, k4 = keys
    return {
        "gamma": 1.0 + 0.1 * jax.random.normal(k1, (dim,), jnp.float32),
        "beta": 0.1 * jax.random.normal(k2, (dim,), jnp.float32),
        "mean": 0.1 * jax.random.normal(k3, (dim,), jnp.float32),
        "var": jax.nn.softplus(jax.random.normal(k4, (dim,), jnp.float32)) + 0.5,
    }


def _bn_fold(bn, eps=1e-5):
    scale = bn["gamma"] / jnp.sqrt(bn["var"] + eps)
    shift = bn["beta"] - bn["mean"] * scale
    return scale, shift


def init_raw_params(key, *, scale_num, scale_stride, in_dim, out_dim, kernel_size):
    raw = {"convs": []}
    keys = jax.random.split(key, scale_num + 1)
    for s in range(scale_num):
        ks = kernel_size + int(scale_stride * s)
        sub = jax.random.split(keys[s], 6)
        w_in = jax.random.normal(sub[0], (in_dim, in_dim), jnp.float32) / math.sqrt(in_dim)
        w_conv = jax.random.normal(sub[1], (out_dim, in_dim, ks), jnp.float32) \
            / math.sqrt(in_dim * ks)
        raw["convs"].append({"w_in": w_in, "w_conv": w_conv,
                             "bn": _rand_bn(sub[2:6], out_dim)})
    fsub = jax.random.split(keys[-1], 5)
    raw["w_proj"] = jax.random.normal(fsub[0], (out_dim, scale_num * out_dim),
                                      jnp.float32) / math.sqrt(scale_num * out_dim)
    raw["bn"] = _rand_bn(fsub[1:5], out_dim)
    return raw


def prepare_params(raw, *, scale_num, scale_stride, kernel_size, stride, length,
                   compute_dtype=jnp.bfloat16):
    """Fold in_proj and eval-mode BN scale into the conv weights, lay all scales
    out as one block-zero-padded tap matrix, cast matmul weights to the compute
    dtype (shifts stay f32)."""
    geo = _geometry(length, scale_num=scale_num, scale_stride=scale_stride,
                    kernel_size=kernel_size, stride=stride)
    n_shift = geo["n_shift"]
    c_out, c_in, _ = raw["convs"][0]["w_conv"].shape

    w_all = jnp.zeros((scale_num * c_out, stride * n_shift * c_in), jnp.float32)
    shift_all, w_fold_list = [], []
    for s in range(scale_num):
        r = raw["convs"][s]
        scale, shift = _bn_fold(r["bn"])
        # fold in_proj (1x1) and BN scale: w_fold[o, i, k] = scale[o] * sum_c w_conv[o,c,k] w_in[c,i]
        w_fold = jnp.einsum("ock,ci->oik", r["w_conv"], r["w_in"]) * scale[:, None, None]
        w_fold_list.append(w_fold)
        shift_all.append(shift[:, None])
        for k, (p, q) in enumerate(geo["tap_maps"][s]):
            blk = p * n_shift + q
            w_all = w_all.at[s * c_out:(s + 1) * c_out,
                             blk * c_in:(blk + 1) * c_in].set(w_fold[:, :, k])

    scale_f, shift_f = _bn_fold(raw["bn"])
    return {
        "w_all": w_all.astype(compute_dtype),
        "shift_all": jnp.concatenate(shift_all, axis=0).astype(jnp.float32),
        "w_proj": (raw["w_proj"] * scale_f[:, None]).astype(compute_dtype),
        "shift_f": shift_f[:, None].astype(jnp.float32),
        "w_fold": w_fold_list,           # per-scale folded weights (f32), for reference
        "pad0": geo["pad0"],
    }


# --------------------------- pure-JAX reference -------------------------------


def reference_forward(x, prep, *, scale_num, scale_stride, kernel_size, stride,
                      compute_dtype=jnp.bfloat16):
    """Straightforward per-scale strided conv (with the same folded weights as
    the kernel) -> BN shift -> GELU; concat -> out_proj -> BN shift."""
    n, c_in, length = x.shape
    c_out = prep["shift_f"].shape[0]
    pad0 = (stride - length % stride) % stride
    xc = x.astype(compute_dtype)
    outs = []
    for s in range(scale_num):
        ks = kernel_size + int(scale_stride * s)
        pds = pad0 + ks - stride
        left = pds // 2
        xp = jnp.pad(xc, ((0, 0), (0, 0), (left, pds - left)))
        w = prep["w_fold"][s].astype(compute_dtype)          # (C_out, C_in, K)
        z = lax.conv_general_dilated(xp, w, (stride,), "VALID",
                                     dimension_numbers=("NCH", "OIH", "NCH"),
                                     preferred_element_type=jnp.float32)
        z = z + prep["shift_all"][s * c_out:(s + 1) * c_out][None]
        outs.append(_gelu_tanh(z))
    cat = jnp.concatenate(outs, axis=1).astype(compute_dtype)
    out = jnp.einsum("oc,ncl->nol", prep["w_proj"], cat,
                     preferred_element_type=jnp.float32)
    return out + prep["shift_f"][None]


# ----------------------------------- main -------------------------------------


if __name__ == "__main__":
    scale_num, scale_stride = 3, 2        # conv kernels of size 3, 5, 7
    in_dim, out_dim = 8, 16
    kernel_size, stride = 3, 2
    batch, length = 2, 512                # L_out = 256 -> lane-dense output

    key = jax.random.PRNGKey(0)
    kx, kp = jax.random.split(key)
    x = jax.random.normal(kx, (batch, in_dim, length), jnp.float32)

    raw = init_raw_params(kp, scale_num=scale_num, scale_stride=scale_stride,
                          in_dim=in_dim, out_dim=out_dim, kernel_size=kernel_size)
    prep = prepare_params(raw, scale_num=scale_num, scale_stride=scale_stride,
                          kernel_size=kernel_size, stride=stride, length=length,
                          compute_dtype=jnp.bfloat16)

    out = multi_scale_conv_block(x, prep, scale_num=scale_num,
                                 scale_stride=scale_stride,
                                 kernel_size=kernel_size, stride=stride,
                                 tile_l=1024, compute_dtype=jnp.bfloat16)
    out = jax.block_until_ready(out)

    l_out = -(-length // stride)
    assert out.shape == (batch, out_dim, l_out), out.shape

    ref = reference_forward(x, prep, scale_num=scale_num,
                            scale_stride=scale_stride,
                            kernel_size=kernel_size, stride=stride,
                            compute_dtype=jnp.bfloat16)
    ref = jnp.asarray(ref, jnp.float32)
    max_err = float(jnp.max(jnp.abs(out.astype(jnp.float32) - ref)))
    tol = 1e-2 + 2e-2 * max(1.0, float(jnp.max(jnp.abs(ref))))
    if max_err < tol:
        print("KERNEL_OK")
    else:
        raise SystemExit(f"mismatch vs reference: max abs err = {max_err} (tol {tol})")
</pallas_src>

<mosaic_0001>
module attributes {stable_mosaic.version = 11 : i64} {
  func.func @_msconv_kernel(%arg0: i32, %arg1: i32, %arg2: memref<1x2x8x384xbf16, #tpu.memory_space<vmem>>, %arg3: memref<48x64xbf16, #tpu.memory_space<vmem>>, %arg4: memref<48x1xf32, #tpu.memory_space<vmem>>, %arg5: memref<16x48xbf16, #tpu.memory_space<vmem>>, %arg6: memref<16x1xf32, #tpu.memory_space<vmem>>, %arg7: memref<1x16x256xbf16, #tpu.memory_space<vmem>>) attributes {dimension_semantics = [#tpu.dimension_semantics<parallel>, #tpu.dimension_semantics<parallel>], iteration_bounds = array<i64: 2, 1>, scalar_prefetch = 0 : i64, scratch_operands = 0 : i64, tpu.core_type = #tpu.core_type<tc>, window_params = [{transform_indices = @transform_0, window_bounds = array<i64: 1, 2, 8, 384>}, {pipeline_mode = #tpu.pipeline_mode<synchronous>, transform_indices = @transform_1, window_bounds = array<i64: 48, 64>}, {pipeline_mode = #tpu.pipeline_mode<synchronous>, transform_indices = @transform_2, window_bounds = array<i64: 48, 1>}, {pipeline_mode = #tpu.pipeline_mode<synchronous>, transform_indices = @transform_3, window_bounds = array<i64: 16, 48>}, {pipeline_mode = #tpu.pipeline_mode<synchronous>, transform_indices = @transform_4, window_bounds = array<i64: 16, 1>}, {transform_indices = @transform_5, window_bounds = array<i64: 1, 16, 256>}]} {
    %c256_i32 = arith.constant 256 : i32
    %0 = arith.muli %arg1, %c256_i32 : i32
    %1 = tpu.assume_multiple %0, 256 : i32
    %c0 = arith.constant 0 : index
    %c0_0 = arith.constant 0 : index
    %c0_1 = arith.constant 0 : index
    %2 = arith.index_cast %1 : i32 to index
    %3 = vector.load %arg2[%c0, %c0_0, %c0_1, %2] : memref<1x2x8x384xbf16, #tpu.memory_space<vmem>>, vector<1x1x8x384xbf16>
    %4 = vector.shape_cast %3 : vector<1x1x8x384xbf16> to vector<8x384xbf16>
    %5 = vector.extract_strided_slice %4 {offsets = [0, 0], sizes = [8, 256], strides = [1, 1]} : vector<8x384xbf16> to vector<8x256xbf16>
    %6 = vector.extract_strided_slice %4 {offsets = [0, 1], sizes = [8, 256], strides = [1, 1]} : vector<8x384xbf16> to vector<8x256xbf16>
    %7 = vector.extract_strided_slice %4 {offsets = [0, 2], sizes = [8, 256], strides = [1, 1]} : vector<8x384xbf16> to vector<8x256xbf16>
    %8 = vector.extract_strided_slice %4 {offsets = [0, 3], sizes = [8, 256], strides = [1, 1]} : vector<8x384xbf16> to vector<8x256xbf16>
    %c0_2 = arith.constant 0 : index
    %c1 = arith.constant 1 : index
    %c0_3 = arith.constant 0 : index
    %9 = arith.index_cast %1 : i32 to index
    %10 = vector.load %arg2[%c0_2, %c1, %c0_3, %9] : memref<1x2x8x384xbf16, #tpu.memory_space<vmem>>, vector<1x1x8x384xbf16>
    %11 = vector.shape_cast %10 : vector<1x1x8x384xbf16> to vector<8x384xbf16>
    %12 = vector.extract_strided_slice %11 {offsets = [0, 0], sizes = [8, 256], strides = [1, 1]} : vector<8x384xbf16> to vector<8x256xbf16>
    %13 = vector.extract_strided_slice %11 {offsets = [0, 1], sizes = [8, 256], strides = [1, 1]} : vector<8x384xbf16> to vector<8x256xbf16>
    %14 = vector.extract_strided_slice %11 {offsets = [0, 2], sizes = [8, 256], strides = [1, 1]} : vector<8x384xbf16> to vector<8x256xbf16>
    %15 = vector.extract_strided_slice %11 {offsets = [0, 3], sizes = [8, 256], strides = [1, 1]} : vector<8x384xbf16> to vector<8x256xbf16>
    %16 = tpu.concatenate %5, %6, %7, %8, %12, %13, %14, %15 in 0 : vector<8x256xbf16>, vector<8x256xbf16>, vector<8x256xbf16>, vector<8x256xbf16>, vector<8x256xbf16>, vector<8x256xbf16>, vector<8x256xbf16>, vector<8x256xbf16> -> vector<64x256xbf16>
    %c0_4 = arith.constant 0 : index
    %c0_5 = arith.constant 0 : index
    %17 = vector.load %arg3[%c0_4, %c0_5] : memref<48x64xbf16, #tpu.memory_space<vmem>>, vector<48x64xbf16>
    %cst = arith.constant dense<0.000000e+00> : vector<48x256xf32>
    %18 = tpu.matmul %17, %16, %cst {dimension_numbers = #tpu.dot_dimension_numbers<[1], [0], [0], [1], [0, 0, 1, 1], [], []>} : vector<48x64xbf16>, vector<64x256xbf16>, vector<48x256xf32> -> vector<48x256xf32>
    %c0_6 = arith.constant 0 : index
    %c0_7 = arith.constant 0 : index
    %19 = vector.load %arg4[%c0_6, %c0_7] : memref<48x1xf32, #tpu.memory_space<vmem>>, vector<48x1xf32>
    %20 = vector.broadcast %19 : vector<48x1xf32> to vector<48x256xf32>
    %21 = arith.addf %18, %20 : vector<48x256xf32>
    %cst_8 = arith.constant 5.000000e-01 : f32
    %22 = vector.broadcast %cst_8 : f32 to vector<48x256xf32>
    %23 = arith.mulf %22, %21 : vector<48x256xf32>
    %cst_9 = arith.constant 4.471500e-02 : f32
    %24 = vector.broadcast %cst_9 : f32 to vector<48x256xf32>
    %25 = arith.mulf %24, %21 : vector<48x256xf32>
    %26 = arith.mulf %25, %21 : vector<48x256xf32>
    %27 = arith.mulf %26, %21 : vector<48x256xf32>
    %28 = arith.addf %21, %27 : vector<48x256xf32>
    %cst_10 = arith.constant 0.797884583 : f32
    %29 = vector.broadcast %cst_10 : f32 to vector<48x256xf32>
    %30 = arith.mulf %29, %28 : vector<48x256xf32>
    %31 = math.tanh %30 : vector<48x256xf32>
    %cst_11 = arith.constant 1.000000e+00 : f32
    %32 = vector.broadcast %cst_11 : f32 to vector<48x256xf32>
    %33 = arith.addf %32, %31 : vector<48x256xf32>
    %34 = arith.mulf %23, %33 : vector<48x256xf32>
    %c0_12 = arith.constant 0 : index
    %c0_13 = arith.constant 0 : index
    %35 = vector.load %arg5[%c0_12, %c0_13] : memref<16x48xbf16, #tpu.memory_space<vmem>>, vector<16x48xbf16>
    %36 = arith.truncf %34 : vector<48x256xf32> to vector<48x256xbf16>
    %cst_14 = arith.constant dense<0.000000e+00> : vector<16x256xf32>
    %37 = tpu.matmul %35, %36, %cst_14 {dimension_numbers = #tpu.dot_dimension_numbers<[1], [0], [0], [1], [0, 0, 1, 1], [], []>} : vector<16x48xbf16>, vector<48x256xbf16>, vector<16x256xf32> -> vector<16x256xf32>
    %c0_15 = arith.constant 0 : index
    %c0_16 = arith.constant 0 : index
    %38 = vector.load %arg6[%c0_15, %c0_16] : memref<16x1xf32, #tpu.memory_space<vmem>>, vector<16x1xf32>
    %39 = vector.broadcast %38 : vector<16x1xf32> to vector<16x256xf32>
    %40 = arith.addf %37, %39 : vector<16x256xf32>
    %41 = arith.truncf %40 : vector<16x256xf32> to vector<16x256xbf16>
    %c0_17 = arith.constant 0 : index
    %c0_18 = arith.constant 0 : index
    %c0_19 = arith.constant 0 : index
    %42 = vector.load %arg7[%c0_17, %c0_18, %c0_19] : memref<1x16x256xbf16, #tpu.memory_space<vmem>>, vector<1x16x256xbf16>
    %43 = vector.shape_cast %42 : vector<1x16x256xbf16> to vector<16x256xbf16>
    %44 = vector.shape_cast %41 : vector<16x256xbf16> to vector<1x16x256xbf16>
    tpu.vector_store %arg7[%c0_17, %c0_18, %c0_19], %44 {strides = array<i32>} : memref<1x16x256xbf16, #tpu.memory_space<vmem>>, vector<1x16x256xbf16>,
    return
  }
  func.func @transform_0(%arg0: i32, %arg1: i32) -> (i32, i32, i32, i32) {
    %c0_i32 = arith.constant 0 : i32
    %c0_i32_0 = arith.constant 0 : i32
    %c0_i32_1 = arith.constant 0 : i32
    %c0_i32_2 = arith.constant 0 : i32
    return %arg0, %c0_i32, %c0_i32_0, %c0_i32_1 : i32, i32, i32, i32
  }
  func.func @transform_1(%arg0: i32, %arg1: i32) -> (i32, i32) {
    %c0_i32 = arith.constant 0 : i32
    %c0_i32_0 = arith.constant 0 : i32
    %c0_i32_1 = arith.constant 0 : i32
    return %c0_i32, %c0_i32_0 : i32, i32
  }
  func.func @transform_2(%arg0: i32, %arg1: i32) -> (i32, i32) {
    %c0_i32 = arith.constant 0 : i32
    %c0_i32_0 = arith.constant 0 : i32
    %c0_i32_1 = arith.constant 0 : i32
    return %c0_i32, %c0_i32_0 : i32, i32
  }
  func.func @transform_3(%arg0: i32, %arg1: i32) -> (i32, i32) {
    %c0_i32 = arith.constant 0 : i32
    %c0_i32_0 = arith.constant 0 : i32
    %c0_i32_1 = arith.constant 0 : i32
    return %c0_i32, %c0_i32_0 : i32, i32
  }
  func.func @transform_4(%arg0: i32, %arg1: i32) -> (i32, i32) {
    %c0_i32 = arith.constant 0 : i32
    %c0_i32_0 = arith.constant 0 : i32
    %c0_i32_1 = arith.constant 0 : i32
    return %c0_i32, %c0_i32_0 : i32, i32
  }
  func.func @transform_5(%arg0: i32, %arg1: i32) -> (i32, i32, i32) {
    %c0_i32 = arith.constant 0 : i32
    %c0_i32_0 = arith.constant 0 : i32
    return %arg0, %c0_i32, %arg1 : i32, i32, i32
  }
}

</mosaic_0001>

<llo_original>
// kernel: tpu_custom_call.1
$region0: #{tpu_custom_call.1}
  #allocation0 [shape = 'u32[]', space=smem, size = 0x4, offset = 0x4, fixed_abs, tag = 'smem constant byte address 0x4 - core index']
  #allocation1 [shape = 'u32[144,128]{1,0:T(1,128)}', space=vmem, size = 0x12000, scoped, tag = 'internal scratch']
  %s0 = inlined_call_operand.vmem [shape: bf16[2,2,8,384], index: 0, kind: input, shape index: {}]
  %s1 = inlined_call_operand.hbm [shape: bf16[48,64], index: 1, kind: input, shape index: {}]
  %s2 = inlined_call_operand.vmem [shape: f32[48,1], index: 2, kind: input, shape index: {}]
  %s3 = inlined_call_operand.vmem [shape: bf16[16,48], index: 3, kind: input, shape index: {}]
  %s4 = inlined_call_operand.vmem [shape: f32[16,1], index: 4, kind: input, shape index: {}]
  %s5 = inlined_call_operand.hbm [shape: bf16[2,16,256], index: 5, kind: output, shape index: {}]
  %s6 = sld [smem:[#allocation0]]
  $region57: #{tpu_custom_call.1} parent=0
    _
  %s8 = ssub.s32 1, %s6
  %s9 = scalar_select 0, %s8, %s6
  $region1: #{tpu_custom_call.1} parent=0
    #allocation2 [shape = 'u8[12288]{0}', space=vmem, size = 0x3000, scoped, tag = 'input window, operand 1, single buffered']
    #allocation3 [shape = 's32[2]{0}', space=sflag, size = 0x8, scoped, tag = 'scoped memory for tpu_custom_call.1']
    #allocation4 [shape = 's32[2]{0}', space=sflag, size = 0x8, scoped, tag = 'scoped memory for tpu_custom_call.1']
    #allocation5 [shape = 'u8[16384]{0}', space=vmem, size = 0x4000, scoped, tag = 'output window, operand 0']
    %10 = vsyncpa [#allocation3], 0
    %11 = vsyncpa [#allocation4], 0
    %s12 = scalar_lea.sflag [#allocation4], 1
    %13 = vsyncpa %s12, 0
    loop: start=0, step=1, limit=4
    $region2: #{tpu_custom_call.1} parent=1 // loop_pre_header
      _
    $region3: #{tpu_custom_call.1} parent=1 // loop_header
      %s15 = sphi 0, %s19
      %p16 = scmp.ge.s32.totalorder %s15, 4
      %s22 = sphi 0, %s34
      %s23 = sphi 0, %s30
      %s24 = sphi 0, %s22
      %s25 = sphi 0, %s23
      %s26 = sphi 0, %s24
      %s27 = sphi 0, %s25
      %s37 = sphi 0, %s39
      %s40 = sphi 0, %s37
      %s41 = sphi 0, %s40
      %s57 = sphi 0, %s41
      %s61 = sphi 0, %s61
      %s63 = sphi 0, %s61
      %s64 = sphi 0, %s63
      %s78 = sphi 0, %s64
      %s82 = sphi 0, %s82
      %s84 = sphi 0, %s82
      %s85 = sphi 0, %s84
      %s99 = sphi 0, %s85
      %s103 = sphi 0, %s103
      %s105 = sphi 0, %s103
      %s106 = sphi 0, %s105
      %s120 = sphi 0, %s106
      %s124 = sphi 0, %s124
      %s126 = sphi 0, %s124
      %s127 = sphi 0, %s126
      %s141 = sphi 0, %s127
      %s149 = sphi 0, %s151
      %s152 = sphi 0, %s149
      %s153 = sphi 0, %s152
      %s169 = sphi 0, %s153
    $region4: #{tpu_custom_call.1} parent=1 // loop_header_branch
      %18 = sbr.rel (%p16) target = $region8
    $region5: #{tpu_custom_call.1} parent=1 // loop_body
      %s20 = ssub.s32 %s15, 1
      %s21 = ssub.s32 %s15, 2
      %s28 = sadd.s32 1, %s23
      %p29 = scmp.ge.s32.totalorder %s28, 1
      %s30 = scalar_select %p29, 0, %s28
      %s31 = sadd.s32 1, %s22
      %s32 = scalar_select %p29, %s31, %s22
      %p33 = scmp.ge.s32.totalorder %s32, 2
      %s34 = scalar_select %p33, 0, %s32
      %s35 = ssub.s32 %s22, %s34
      %p36 = scmp.eq.s32.totalorder %s35, 0
      %s38 = sadd.s32 %s37, 1
      %s39 = scalar_select %p36, %s37, %s38
      %p42 = pneg %p36
      %p43 = scmp.eq.s32.totalorder %s15, 1
      %p44 = por %p42, %p43
      %p45 = scmp.ne.s32.totalorder %s37, %s40
      %p46 = scmp.eq.s32.totalorder %s15, 0
      %p47 = por %p45, %p46
      %p48 = scmp.ne.s32.totalorder %s37, %s40
      %p49 = scmp.eq.s32.totalorder %s20, 1
      %p50 = por %p48, %p49
      %p51 = scmp.ne.s32.totalorder %s40, %s41
      %p52 = scmp.eq.s32.totalorder %s20, 0
      %p53 = por %p51, %p52
      %p54 = scmp.ne.s32.totalorder %s40, %s41
      %p55 = scmp.eq.s32.totalorder %s21, 1
      %p56 = por %p54, %p55
      %p58 = scmp.ne.s32.totalorder %s41, %s57
      %p59 = scmp.eq.s32.totalorder %s21, 0
      %p60 = por %p58, %p59
      %s62 = sadd.s32 %s61, 1
      %p65 = scmp.eq.s32.totalorder %s15, 1
      %p66 = scmp.ne.s32.totalorder %s61, %s63
      %p67 = scmp.eq.s32.totalorder %s15, 0
      %p68 = por %p66, %p67
      %p69 = scmp.ne.s32.totalorder %s61, %s63
      %p70 = scmp.eq.s32.totalorder %s20, 1
      %p71 = por %p69, %p70
      %p72 = scmp.ne.s32.totalorder %s63, %s64
      %p73 = scmp.eq.s32.totalorder %s20, 0
      %p74 = por %p72, %p73
      %p75 = scmp.ne.s32.totalorder %s63, %s64
      %p76 = scmp.eq.s32.totalorder %s21, 1
      %p77 = por %p75, %p76
      %p79 = scmp.ne.s32.totalorder %s64, %s78
      %p80 = scmp.eq.s32.totalorder %s21, 0
      %p81 = por %p79, %p80
      %s83 = sadd.s32 %s82, 1
      %p86 = scmp.eq.s32.totalorder %s15, 1
      %p87 = scmp.ne.s32.totalorder %s82, %s84
      %p88 = scmp.eq.s32.totalorder %s15, 0
      %p89 = por %p87, %p88
      %p90 = scmp.ne.s32.totalorder %s82, %s84
      %p91 = scmp.eq.s32.totalorder %s20, 1
      %p92 = por %p90, %p91
      %p93 = scmp.ne.s32.totalorder %s84, %s85
      %p94 = scmp.eq.s32.totalorder %s20, 0
      %p95 = por %p93, %p94
      %p96 = scmp.ne.s32.totalorder %s84, %s85
      %p97 = scmp.eq.s32.totalorder %s21, 1
      %p98 = por %p96, %p97
      %p100 = scmp.ne.s32.totalorder %s85, %s99
      %p101 = scmp.eq.s32.totalorder %s21, 0
      %p102 = por %p100, %p101
      %s104 = sadd.s32 %s103, 1
      %p107 = scmp.eq.s32.totalorder %s15, 1
      %p108 = scmp.ne.s32.totalorder %s103, %s105
      %p109 = scmp.eq.s32.totalorder %s15, 0
      %p110 = por %p108, %p109
      %p111 = scmp.ne.s32.totalorder %s103, %s105
      %p112 = scmp.eq.s32.totalorder %s20, 1
      %p113 = por %p111, %p112
      %p114 = scmp.ne.s32.totalorder %s105, %s106
      %p115 = scmp.eq.s32.totalorder %s20, 0
      %p116 = por %p114, %p115
      %p117 = scmp.ne.s32.totalorder %s105, %s106
      %p118 = scmp.eq.s32.totalorder %s21, 1
      %p119 = por %p117, %p118
      %p121 = scmp.ne.s32.totalorder %s106, %s120
      %p122 = scmp.eq.s32.totalorder %s21, 0
      %p123 = por %p121, %p122
      %s125 = sadd.s32 %s124, 1
      %p128 = scmp.eq.s32.totalorder %s15, 1
      %p129 = scmp.ne.s32.totalorder %s124, %s126
      %p130 = scmp.eq.s32.totalorder %s15, 0
      %p131 = por %p129, %p130
      %p132 = scmp.ne.s32.totalorder %s124, %s126
      %p133 = scmp.eq.s32.totalorder %s20, 1
      %p134 = por %p132, %p133
      %p135 = scmp.ne.s32.totalorder %s126, %s127
      %p136 = scmp.eq.s32.totalorder %s20, 0
      %p137 = por %p135, %p136
      %p138 = scmp.ne.s32.totalorder %s126, %s127
      %p139 = scmp.eq.s32.totalorder %s21, 1
      %p140 = por %p138, %p139
      %p142 = scmp.ne.s32.totalorder %s127, %s141
      %p143 = scmp.eq.s32.totalorder %s21, 0
      %p144 = por %p142, %p143
      %s145 = ssub.s32 %s22, %s34
      %s146 = ssub.s32 %s23, %s30
      %s147 = sor.u32 %s145, %s146
      %p148 = scmp.eq.s32.totalorder %s147, 0
      %s150 = sadd.s32 %s149, 1
      %s151 = scalar_select %p148, %s149, %s150
      %p154 = pneg %p148
      %p155 = scmp.eq.s32.totalorder %s15, 1
      %p156 = por %p154, %p155
      %p157 = scmp.ne.s32.totalorder %s149, %s152
      %p158 = scmp.eq.s32.totalorder %s15, 0
      %p159 = por %p157, %p158
      %p160 = scmp.ne.s32.totalorder %s149, %s152
      %p161 = scmp.eq.s32.totalorder %s20, 1
      %p162 = por %p160, %p161
      %p163 = scmp.ne.s32.totalorder %s152, %s153
      %p164 = scmp.eq.s32.totalorder %s20, 0
      %p165 = por %p163, %p164
      %p166 = scmp.ne.s32.totalorder %s152, %s153
      %p167 = scmp.eq.s32.totalorder %s21, 1
      %p168 = por %p166, %p167
      %p170 = scmp.ne.s32.totalorder %s153, %s169
      %p171 = scmp.eq.s32.totalorder %s21, 0
      %p172 = por %p170, %p171
      %p173 = scmp.le.s32.totalorder 1, %s15
      %p174 = scmp.lt.s32.totalorder %s15, 3
      %p175 = pnand %p173, %p174
      %p176 = pneg %p175
      // Predicated region
      $region9: #{tpu_custom_call.1} parent=5 // pred_check
        _
      $region10: #{tpu_custom_call.1} parent=5 // pred_check_branch
        %178 = sbr.rel (%p175) target = $region12
      $region11: #{tpu_custom_call.1} parent=5 // pred_region
        %s179 = ssub.s32 %s15, 1
        // Predicated region
        $region13: #{tpu_custom_call.1} parent=11 // pred_check
          %p180 = pneg %p74
        $region14: #{tpu_custom_call.1} parent=11 // pred_check_branch
          %182 = sbr.rel (%p180) target = $region16
        $region15: #{tpu_custom_call.1} parent=11 // pred_region
          %s184 = ssub.s32 384, 384
          %185 = vsyncadd [#allocation3], %s184
          %s186 = sshll.u32 [#allocation2], 4
          %s187 = int_to_ptr.vmem [resolvable:$true] %s186
          %192 = dma.hbm_to_vmem [thread:$0]  %s1, 384, %s187, [#allocation3], 64, 64, 4
        $region16: #{tpu_custom_call.1} parent=11 // pred_fallthru
          _
        // Predicated region
        $region17: #{tpu_custom_call.1} parent=11 // pred_check
          %p193 = pneg %p95
        $region18: #{tpu_custom_call.1} parent=11 // pred_check_branch
          %195 = sbr.rel (%p193) target = $region20
        $region19: #{tpu_custom_call.1} parent=11 // pred_region
          _
        $region20: #{tpu_custom_call.1} parent=11 // pred_fallthru
          _
        // Predicated region
        $region21: #{tpu_custom_call.1} parent=11 // pred_check
          %p196 = pneg %p116
        $region22: #{tpu_custom_call.1} parent=11 // pred_check_branch
          %198 = sbr.rel (%p196) target = $region24
        $region23: #{tpu_custom_call.1} parent=11 // pred_region
          _
        $region24: #{tpu_custom_call.1} parent=11 // pred_fallthru
          _
        // Predicated region
        $region25: #{tpu_custom_call.1} parent=11 // pred_check
          %p199 = pneg %p137
        $region26: #{tpu_custom_call.1} parent=11 // pred_check_branch
          %201 = sbr.rel (%p199) target = $region28
        $region27: #{tpu_custom_call.1} parent=11 // pred_region
          _
        $region28: #{tpu_custom_call.1} parent=11 // pred_fallthru
          _
      $region12: #{tpu_custom_call.1} parent=5 // pred_fallthru
        _
      %p202 = scmp.lt.s32.totalorder %s15, 2
      // Predicated region
      $region29: #{tpu_custom_call.1} parent=5 // pred_check
        %p203 = pneg %p202
      $region30: #{tpu_custom_call.1} parent=5 // pred_check_branch
        %205 = sbr.rel (%p203) target = $region32
      $region31: #{tpu_custom_call.1} parent=5 // pred_region
        // Predicated region
        $region33: #{tpu_custom_call.1} parent=31 // pred_check
          %p206 = pneg %p47
        $region34: #{tpu_custom_call.1} parent=31 // pred_check_branch
          %208 = sbr.rel (%p206) target = $region36
        $region35: #{tpu_custom_call.1} parent=31 // pred_region
          %p209 = scmp.lt.s32.totalorder %s22, 1
          %s210 = scalar_select %p209, %s22, 1
          %s211 = smul.addr %s210, 6
          %s212 = smul.addr %s211, 4
          %s213 = scalar_lea.vmem %s0, %s212
        $region36: #{tpu_custom_call.1} parent=31 // pred_fallthru
          _
      $region32: #{tpu_custom_call.1} parent=5 // pred_fallthru
        _
      %p214 = scmp.le.s32.totalorder 1, %s15
      %p215 = scmp.lt.s32.totalorder %s15, 3
      %p216 = pnand %p214, %p215
      %p217 = pneg %p216
      // Predicated region
      $region37: #{tpu_custom_call.1} parent=5 // pred_check
        _
      $region38: #{tpu_custom_call.1} parent=5 // pred_check_branch
        %219 = sbr.rel (%p216) target = $region40
      $region39: #{tpu_custom_call.1} parent=5 // pred_region
        %s220 = ssub.s32 %s15, 1
        // Predicated region
        $region41: #{tpu_custom_call.1} parent=39 // pred_check
          %p221 = pneg %p74
        $region42: #{tpu_custom_call.1} parent=39 // pred_check_branch
          %223 = sbr.rel (%p221) target = $region44
        $region43: #{tpu_custom_call.1} parent=39 // pred_region
          %224 = dma.done [#allocation3], 384
        $region44: #{tpu_custom_call.1} parent=39 // pred_fallthru
          _
        %p225 = scmp.lt.s32.totalorder %s24, 1
        %s226 = scalar_select %p225, %s24, 1
        %s227 = smul.addr %s226, 6
        %s228 = smul.addr %s227, 4
        %s229 = scalar_lea.vmem %s0, %s228
        %p230 = pneg %p53
        %p231 = pneg %p50
        %p232 = pneg %p74
        %p233 = pneg %p71
        %p234 = pneg %p95
        %p235 = pneg %p92
        %p236 = pneg %p116
        %p237 = pneg %p113
        %p238 = pneg %p137
        %p239 = pneg %p134
        %p240 = pneg %p165
        %p241 = pneg %p162
        %s242 = sand.u32 %s152, 1
        %s243 = scalar_lea.sflag [#allocation4], %s242
        %s244 = sand.u32 %s152, 1
        %s245 = smul.addr %s244, 16
        %s246 = scalar_lea.vmem [#allocation5], %s245
        %p247 = scmp.lt.s32.totalorder %s24, 1
        %s248 = scalar_select %p247, %s24, 1
        %s249 = smul.addr %s248, 6
        %s250 = smul.addr %s249, 4
        %s251 = scalar_lea.vmem %s0, %s250
        %s252 = smul.u32 2, %s25
        %s254 = smul.u32 %s25, 256
        %s255 = sshra.s32 %s254, 7
        %s256 = sand.u32 %s254, 127
        %s257 = smul.addr %s255, 4
        %s258 = scalar_lea.vmem %s251, %s257
        %v259 = vld [vmem:[%s258] sm:$0xff]
        %v260 = vld [vmem:[%s258 + $0x8] sm:$0xf]
        %s261 = sadd.s32 %s255, 3
        %s262 = smul.addr %s261, 4
        %s263 = scalar_lea.vmem %s251, %s262
        %v264 = vld [vmem:[%s263] sm:$0xff]
        %v265 = vld [vmem:[%s263 + $0x8] sm:$0xf]
        %v267 = vunpack.c.l.b16 %v259
        %v268 = vunpack.c.h.b16 %v259
        %v269 = vpack.c.b16 %v267, %v267
        %v270 = vpack.c.b16 %v268, %v268
        %v272 = vunpack.c.l.b16 %v260
        %v273 = vpack.c.b16 %v272, %v272
        %274 = vrot.lane.b32.xlu0 %v269, 127
        %v275 = vpop.permute.xlu0 %274
        %276 = vrot.lane.b32.xlu0 %v270, 127
        %v277 = vpop.permute.xlu0 %276
        %278 = vrot.lane.b32.xlu0 %v273, 127
        %v279 = vpop.permute.xlu0 %278
        %vm280 = vcmask 1039360
        %v281 = vsel %vm280, %v275, %v277
        %v282 = vsel %vm280, %v277, %v279
        %283 = vrot.lane.b32.xlu0 %v269, 126
        %v284 = vpop.permute.xlu0 %283
        %285 = vrot.lane.b32.xlu0 %v270, 126
        %v286 = vpop.permute.xlu0 %285
        %287 = vrot.lane.b32.xlu0 %v273, 126
        %v288 = vpop.permute.xlu0 %287
        %vm289 = vcmask 1031168
        %v290 = vsel %vm289, %v284, %v286
        %v291 = vsel %vm289, %v286, %v288
        %292 = vrot.lane.b32.xlu0 %v269, 125
        %v293 = vpop.permute.xlu0 %292
        %294 = vrot.lane.b32.xlu0 %v270, 125
        %v295 = vpop.permute.xlu0 %294
        %296 = vrot.lane.b32.xlu0 %v273, 125
        %v297 = vpop.permute.xlu0 %296
        %vm298 = vcmask 1022976
        %v299 = vsel %vm298, %v293, %v295
        %v300 = vsel %vm298, %v295, %v297
        %v302 = vunpack.c.l.b16 %v264
        %v303 = vunpack.c.h.b16 %v264
        %v304 = vpack.c.b16 %v302, %v302
        %v305 = vpack.c.b16 %v303, %v303
        %v307 = vunpack.c.l.b16 %v265
        %v308 = vpack.c.b16 %v307, %v307
        %309 = vrot.lane.b32.xlu0 %v304, 127
        %v310 = vpop.permute.xlu0 %309
        %311 = vrot.lane.b32.xlu0 %v305, 127
        %v312 = vpop.permute.xlu0 %311
        %313 = vrot.lane.b32.xlu0 %v308, 127
        %v314 = vpop.permute.xlu0 %313
        %v315 = vsel %vm280, %v310, %v312
        %v316 = vsel %vm280, %v312, %v314
        %317 = vrot.lane.b32.xlu0 %v304, 126
        %v318 = vpop.permute.xlu0 %317
        %319 = vrot.lane.b32.xlu0 %v305, 126
        %v320 = vpop.permute.xlu0 %319
        %321 = vrot.lane.b32.xlu0 %v308, 126
        %v322 = vpop.permute.xlu0 %321
        %v323 = vsel %vm289, %v318, %v320
        %v324 = vsel %vm289, %v320, %v322
        %325 = vrot.lane.b32.xlu0 %v304, 125
        %v326 = vpop.permute.xlu0 %325
        %327 = vrot.lane.b32.xlu0 %v305, 125
        %v328 = vpop.permute.xlu0 %327
        %329 = vrot.lane.b32.xlu0 %v308, 125
        %v330 = vpop.permute.xlu0 %329
        %v331 = vsel %vm298, %v326, %v328
        %v332 = vsel %vm298, %v328, %v330
        %vm333 = vcmask 1043456
        %v336 = vsel %vm333, %v269, %v281
        %v340 = vsel %vm333, %v270, %v282
        %v344 = vsel %vm333, %v290, %v299
        %v348 = vsel %vm333, %v291, %v300
        %v352 = vsel %vm333, %v304, %v315
        %v356 = vsel %vm333, %v305, %v316
        %v360 = vsel %vm333, %v323, %v331
        %v364 = vsel %vm333, %v324, %v332
        %v366 = vld [vmem:[#allocation2] sm:$0xf]
        %v367 = vld [vmem:[#allocation2 + $0x4] sm:$0xf]
        %v368 = vld [vmem:[#allocation2 + $0x8] sm:$0xf]
        %v369 = vld [vmem:[#allocation2 + $0xc] sm:$0xf]
        %v370 = vld [vmem:[#allocation2 + $0x10] sm:$0xf]
        %v371 = vld [vmem:[#allocation2 + $0x14] sm:$0xf]
        %v372 = vld [vmem:[%s2] sm:$0xff]
        %v373 = vld [vmem:[%s2 + $0x8] sm:$0xff]
        %v374 = vld [vmem:[%s2 + $0x10] sm:$0xff]
        %v375 = vld [vmem:[%s2 + $0x18] sm:$0xff]
        %v376 = vld [vmem:[%s2 + $0x20] sm:$0xff]
        %v377 = vld [vmem:[%s2 + $0x28] sm:$0xff]
        %379 = vset.pattern.permute.xlu0 0
        %380 = vperm.xlu0 %379, %v372
        %v381 = vpop.permute.xlu0 %380
        %384 = vset.pattern.permute.xlu0 0
        %385 = vperm.xlu0 %384, %v373
        %v386 = vpop.permute.xlu0 %385
        %389 = vset.pattern.permute.xlu0 0
        %390 = vperm.xlu0 %389, %v374
        %v391 = vpop.permute.xlu0 %390
        %394 = vset.pattern.permute.xlu0 0
        %395 = vperm.xlu0 %394, %v375
        %v396 = vpop.permute.xlu0 %395
        %399 = vset.pattern.permute.xlu0 0
        %400 = vperm.xlu0 %399, %v376
        %v401 = vpop.permute.xlu0 %400
        %404 = vset.pattern.permute.xlu0 0
        %405 = vperm.xlu0 %404, %v377
        %v406 = vpop.permute.xlu0 %405
        %v414 = vunpack.c.l.b16 %v366
        %v415 = vunpack.c.l.b16 %v367
        %v416 = vunpack.c.l.b16 %v368
        %v417 = vunpack.c.l.b16 %v369
        %v418 = vunpack.c.l.b16 %v370
        %v419 = vunpack.c.l.b16 %v371
        %v420 = vpack.c.b16 %v415, %v414
        %v421 = vpack.c.b16 %v417, %v416
        %v422 = vpack.c.b16 %v419, %v418
        %vm423 = vcmask 523264
        %v425 = vsel %vm423, %v420, 0
        %v428 = vsel %vm423, %v421, 0
        %v431 = vsel %vm423, %v422, 0
        %433 = vmatprep.subr.bf16.mxu0 0
        %434 = vmatpush1.bf16.msra.mxu0 0
        %435 = vmatprep.subr.bf16.mxu0 0
        %436 = vmatpush1.bf16.msra.mxu0 0
        %437 = vmatprep.subr.bf16.mxu0 0
        %438 = vmatpush1.bf16.msra.mxu0 0
        %439 = vmatprep.subr.bf16.mxu0 0
        %440 = vmatpush1.bf16.msra.mxu0 0
        %441 = vmatprep.subr.bf16.mxu0 %v364
        %442 = vmatpush1.bf16.msra.mxu0 %v360
        %443 = vmatprep.subr.bf16.mxu0 %v356
        %444 = vmatpush1.bf16.msra.mxu0 %v352
        %445 = vmatprep.subr.bf16.mxu0 %v348
        %446 = vmatpush1.bf16.msra.mxu0 %v344
        %447 = vmatprep.subr.bf16.mxu0 %v340
        %448 = vmatpush1.bf16.msra.mxu0 %v336
        %449 = vmatprep.subr.bf16.mxu0 0
        %450 = vmatpush2.bf16.msra.mxu0 0
        %451 = vmatprep.subr.bf16.mxu0 0
        %452 = vmatpush2.bf16.msra.mxu0 0
        %453 = vmatprep.subr.bf16.mxu0 0
        %454 = vmatpush2.bf16.msra.mxu0 0
        %455 = vmatprep.subr.bf16.mxu0 0
        %456 = vmatpush2.bf16.msra.mxu0 0
        %457 = vmatprep.subr.bf16.mxu0 0
        %458 = vmatpush2.bf16.msra.mxu0 0
        %459 = vmatprep.subr.bf16.mxu0 0
        %460 = vmatpush2.bf16.msra.mxu0 0
        %461 = vmatprep.subr.bf16.mxu0 0
        %462 = vmatpush2.bf16.msra.mxu0 0
        %463 = vmatprep.subr.bf16.mxu0 0
        %464 = vmatpush2.bf16.msra.mxu0 0
        %465 = vmatprep.mubr.bf16.mxu0 0
        %466 = vmatmul.mubr.bf16.gmra.mxu0 %v425
        %v467 = vpop.f32.mrf.mxu0
        %v468 = vadd.f32 %v381, %v467
        %v469 = vpop.f32.mrf.mxu0
        %v470 = vadd.f32 %v381, %v469
        %v471 = vpop.f32.mrf.mxu0
        %v472 = vadd.f32 %v386, %v471
        %v473 = vpop.f32.mrf.mxu0
        %v474 = vadd.f32 %v386, %v473
        %475 = vmatprep.mubr.bf16.mxu0 0
        %476 = vmatmul.mubr.bf16.gmra.mxu0 %v428
        %v477 = vpop.f32.mrf.mxu0
        %v478 = vadd.f32 %v391, %v477
        %v479 = vpop.f32.mrf.mxu0
        %v480 = vadd.f32 %v391, %v479
        %v481 = vpop.f32.mrf.mxu0
        %v482 = vadd.f32 %v396, %v481
        %v483 = vpop.f32.mrf.mxu0
        %v484 = vadd.f32 %v396, %v483
        %485 = vmatprep.mubr.bf16.mxu0 0
        %486 = vmatmul.mubr.bf16.gmra.mxu0 %v431
        %v487 = vpop.f32.mrf.mxu0
        %v488 = vadd.f32 %v401, %v487
        %v489 = vpop.f32.mrf.mxu0
        %v490 = vadd.f32 %v401, %v489
        %v491 = vpop.f32.mrf.mxu0
        %v492 = vadd.f32 %v406, %v491
        %v493 = vpop.f32.mrf.mxu0
        %v494 = vadd.f32 %v406, %v493
        %495 = vdwg.mxu0
        %v496 = vmul.f32 %v468, 0.5
        %v497 = vmul.f32 %v470, 0.5
        %v498 = vmul.f32 %v472, 0.5
        %v499 = vmul.f32 %v474, 0.5
        %v500 = vmul.f32 %v478, 0.5
        %v501 = vmul.f32 %v480, 0.5
        %v502 = vmul.f32 %v482, 0.5
        %v503 = vmul.f32 %v484, 0.5
        %v504 = vmul.f32 %v488, 0.5
        %v505 = vmul.f32 %v490, 0.5
        %v506 = vmul.f32 %v492, 0.5
        %v507 = vmul.f32 %v494, 0.5
        %v508 = vmul.f32 %v468, 0.044715
        %v509 = vmul.f32 %v470, 0.044715
        %v510 = vmul.f32 %v472, 0.044715
        %v511 = vmul.f32 %v474, 0.044715
        %v512 = vmul.f32 %v478, 0.044715
        %v513 = vmul.f32 %v480, 0.044715
        %v514 = vmul.f32 %v482, 0.044715
        %v515 = vmul.f32 %v484, 0.044715
        %v516 = vmul.f32 %v488, 0.044715
        %v517 = vmul.f32 %v490, 0.044715
        %v518 = vmul.f32 %v492, 0.044715
        %v519 = vmul.f32 %v494, 0.044715
        %v520 = vmul.f32 %v508, %v468
        %v521 = vmul.f32 %v509, %v470
        %v522 = vmul.f32 %v510, %v472
        %v523 = vmul.f32 %v511, %v474
        %v524 = vmul.f32 %v512, %v478
        %v525 = vmul.f32 %v513, %v480
        %v526 = vmul.f32 %v514, %v482
        %v527 = vmul.f32 %v515, %v484
        %v528 = vmul.f32 %v516, %v488
        %v529 = vmul.f32 %v517, %v490
        %v530 = vmul.f32 %v518, %v492
        %v531 = vmul.f32 %v519, %v494
        %v532 = vmul.f32 %v520, %v468
        %v533 = vmul.f32 %v521, %v470
        %v534 = vmul.f32 %v522, %v472
        %v535 = vmul.f32 %v523, %v474
        %v536 = vmul.f32 %v524, %v478
        %v537 = vmul.f32 %v525, %v480
        %v538 = vmul.f32 %v526, %v482
        %v539 = vmul.f32 %v527, %v484
        %v540 = vmul.f32 %v528, %v488
        %v541 = vmul.f32 %v529, %v490
        %v542 = vmul.f32 %v530, %v492
        %v543 = vmul.f32 %v531, %v494
        %v544 = vadd.f32 %v468, %v532
        %v545 = vadd.f32 %v470, %v533
        %v546 = vadd.f32 %v472, %v534
        %v547 = vadd.f32 %v474, %v535
        %v548 = vadd.f32 %v478, %v536
        %v549 = vadd.f32 %v480, %v537
        %v550 = vadd.f32 %v482, %v538
        %v551 = vadd.f32 %v484, %v539
        %v552 = vadd.f32 %v488, %v540
        %v553 = vadd.f32 %v490, %v541
        %v554 = vadd.f32 %v492, %v542
        %v555 = vadd.f32 %v494, %v543
        %v556 = vmul.f32 %v544, 0.7978846
        %v557 = vmul.f32 %v545, 0.7978846
        %v558 = vmul.f32 %v546, 0.7978846
        %v559 = vmul.f32 %v547, 0.7978846
        %v560 = vmul.f32 %v548, 0.7978846
        %v561 = vmul.f32 %v549, 0.7978846
        %v562 = vmul.f32 %v550, 0.7978846
        %v563 = vmul.f32 %v551, 0.7978846
        %v564 = vmul.f32 %v552, 0.7978846
        %v565 = vmul.f32 %v553, 0.7978846
        %v566 = vmul.f32 %v554, 0.7978846
        %v567 = vmul.f32 %v555, 0.7978846
        %v568 = vtanh.pop %v556
        %v569 = vtanh.pop %v557
        %v570 = vtanh.pop %v558
        %v571 = vtanh.pop %v559
        %v572 = vtanh.pop %v560
        %v573 = vtanh.pop %v561
        %v574 = vtanh.pop %v562
        %v575 = vtanh.pop %v563
        %v576 = vtanh.pop %v564
        %v577 = vtanh.pop %v565
        %v578 = vtanh.pop %v566
        %v579 = vtanh.pop %v567
        %v580 = vadd.f32 %v568, 1.0
        %v581 = vadd.f32 %v569, 1.0
        %v582 = vadd.f32 %v570, 1.0
        %v583 = vadd.f32 %v571, 1.0
        %v584 = vadd.f32 %v572, 1.0
        %v585 = vadd.f32 %v573, 1.0
        %v586 = vadd.f32 %v574, 1.0
        %v587 = vadd.f32 %v575, 1.0
        %v588 = vadd.f32 %v576, 1.0
        %v589 = vadd.f32 %v577, 1.0
        %v590 = vadd.f32 %v578, 1.0
        %v591 = vadd.f32 %v579, 1.0
        %v592 = vmul.f32 %v496, %v580
        %v593 = vmul.f32 %v497, %v581
        %v594 = vmul.f32 %v498, %v582
        %v595 = vmul.f32 %v499, %v583
        %v596 = vmul.f32 %v500, %v584
        %v597 = vmul.f32 %v501, %v585
        %v598 = vmul.f32 %v502, %v586
        %v599 = vmul.f32 %v503, %v587
        %v600 = vmul.f32 %v504, %v588
        %v601 = vmul.f32 %v505, %v589
        %v602 = vmul.f32 %v506, %v590
        %v603 = vmul.f32 %v507, %v591
        %v604 = vld [vmem:[%s3] sm:$0xf]
        %v605 = vld [vmem:[%s3 + $0x4] sm:$0xf]
        %v606 = vpack.c.bf16 %v594, %v592
        %v607 = vpack.c.bf16 %v595, %v593
        %v608 = vpack.c.bf16 %v598, %v596
        %v609 = vpack.c.bf16 %v599, %v597
        %v610 = vpack.c.bf16 %v602, %v600
        %v611 = vpack.c.bf16 %v603, %v601
        %v612 = vld [vmem:[%s4] sm:$0xff]
        %v613 = vld [vmem:[%s4 + $0x8] sm:$0xff]
        %615 = vset.pattern.permute.xlu0 0
        %616 = vperm.xlu0 %615, %v612
        %v617 = vpop.permute.xlu0 %616
        %620 = vset.pattern.permute.xlu0 0
        %621 = vperm.xlu0 %620, %v613
        %v622 = vpop.permute.xlu0 %621
        %v626 = vunpack.c.l.b16 %v604
        %v627 = vunpack.c.l.b16 %v605
        %v628 = vpack.c.b16 %v627, %v626
        %vm629 = vcmask 392192
        %v631 = vsel %vm629, %v628, 0
        %633 = vmatprep.subr.bf16.mxu0 0
        %634 = vmatpush1.bf16.msra.mxu0 0
        %635 = vmatprep.subr.bf16.mxu0 0
        %636 = vmatpush1.bf16.msra.mxu0 0
        %637 = vmatprep.subr.bf16.mxu0 0
        %638 = vmatpush1.bf16.msra.mxu0 0
        %639 = vmatprep.subr.bf16.mxu0 0
        %640 = vmatpush1.bf16.msra.mxu0 0
        %641 = vmatprep.subr.bf16.mxu0 0
        %642 = vmatpush1.bf16.msra.mxu0 0
        %643 = vmatprep.subr.bf16.mxu0 %v611
        %644 = vmatpush1.bf16.msra.mxu0 %v610
        %645 = vmatprep.subr.bf16.mxu0 %v609
        %646 = vmatpush1.bf16.msra.mxu0 %v608
        %647 = vmatprep.subr.bf16.mxu0 %v607
        %648 = vmatpush1.bf16.msra.mxu0 %v606
        %649 = vmatprep.subr.bf16.mxu0 0
        %650 = vmatpush2.bf16.msra.mxu0 0
        %651 = vmatprep.subr.bf16.mxu0 0
        %652 = vmatpush2.bf16.msra.mxu0 0
        %653 = vmatprep.subr.bf16.mxu0 0
        %654 = vmatpush2.bf16.msra.mxu0 0
        %655 = vmatprep.subr.bf16.mxu0 0
        %656 = vmatpush2.bf16.msra.mxu0 0
        %657 = vmatprep.subr.bf16.mxu0 0
        %658 = vmatpush2.bf16.msra.mxu0 0
        %659 = vmatprep.subr.bf16.mxu0 0
        %660 = vmatpush2.bf16.msra.mxu0 0
        %661 = vmatprep.subr.bf16.mxu0 0
        %662 = vmatpush2.bf16.msra.mxu0 0
        %663 = vmatprep.subr.bf16.mxu0 0
        %664 = vmatpush2.bf16.msra.mxu0 0
        %665 = vmatprep.mubr.bf16.mxu0 0
        %666 = vmatmul.mubr.bf16.gmra.mxu0 %v631
        %v667 = vpop.f32.mrf.mxu0
        %v668 = vadd.f32 %v617, %v667
        %v669 = vpop.f32.mrf.mxu0
        %v670 = vadd.f32 %v617, %v669
        %v671 = vpop.f32.mrf.mxu0
        %v672 = vadd.f32 %v622, %v671
        %v673 = vpop.f32.mrf.mxu0
        %v674 = vadd.f32 %v622, %v673
        %675 = vdwg.mxu0
        %v676 = vpack.c.bf16 %v672, %v668
        %v677 = vpack.c.bf16 %v674, %v670
        %v680 = vunpack.c.l.b16 %v676
        %v681 = vunpack.c.l.b16 %v677
        %v682 = vunpack.c.h.b16 %v676
        %v683 = vunpack.c.h.b16 %v677
        %v684 = vpack.c.b16 %v681, %v680
        %v685 = vpack.c.b16 %v683, %v682
        %688 = vst [vmem:[%s246] sm:$0xff] %v684
        %689 = vst [vmem:[%s246 + $0x8] sm:$0xff] %v685
        %s690 = sand.u32 %s152, 1
        %s691 = scalar_lea.sflag [#allocation4], %s690
        %s692 = sand.u32 %s152, 1
        %s693 = smul.addr %s692, 16
        %s694 = scalar_lea.vmem [#allocation5], %s693
        // Predicated region
        $region45: #{tpu_custom_call.1} parent=39 // pred_check
          %p695 = pneg %p162
        $region46: #{tpu_custom_call.1} parent=39 // pred_check_branch
          %697 = sbr.rel (%p695) target = $region48
        $region47: #{tpu_custom_call.1} parent=39 // pred_region
          %s698 = smul.u32 2, %s25
          %s700 = ssub.s32 256, 256
          %701 = vsyncadd %s691, %s700
          %s702 = smul.addr %s24, 4
          %s703 = sadd.s32 %s698, %s702
          %s704 = smul.addr %s703, 64
          %s705 = scalar_lea.hbm %s5, %s704
          %s706 = sshll.u32 %s694, 4
          %s707 = int_to_ptr.vmem [resolvable:$true] %s706
          %712 = dma.vmem_to_hbm [thread:$0]  %s707, 256, %s705, %s691, 128, 128, 8
        $region48: #{tpu_custom_call.1} parent=39 // pred_fallthru
          _
      $region40: #{tpu_custom_call.1} parent=5 // pred_fallthru
        _
      %p713 = scmp.le.s32.totalorder 2, %s15
      // Predicated region
      $region49: #{tpu_custom_call.1} parent=5 // pred_check
        %p714 = pneg %p713
      $region50: #{tpu_custom_call.1} parent=5 // pred_check_branch
        %716 = sbr.rel (%p714) target = $region52
      $region51: #{tpu_custom_call.1} parent=5 // pred_region
        %s717 = ssub.s32 %s15, 2
        // Predicated region
        $region53: #{tpu_custom_call.1} parent=51 // pred_check
          %p718 = pneg %p168
        $region54: #{tpu_custom_call.1} parent=51 // pred_check_branch
          %720 = sbr.rel (%p718) target = $region56
        $region55: #{tpu_custom_call.1} parent=51 // pred_region
          %s721 = sand.u32 %s153, 1
          %s722 = scalar_lea.sflag [#allocation4], %s721
          %s723 = sand.u32 %s153, 1
          %s724 = smul.addr %s723, 16
          %s725 = scalar_lea.vmem [#allocation5], %s724
          %726 = dma.done %s722, 256
        $region56: #{tpu_custom_call.1} parent=51 // pred_fallthru
          _
      $region52: #{tpu_custom_call.1} parent=5 // pred_fallthru
        _
    $region6: #{tpu_custom_call.1} parent=1 // loop_footer
      %s19 = sadd.s32 1, %s15
    $region7: #{tpu_custom_call.1} parent=1 // loop_footer_branch
      %14 = sbr.rel target = $region3
    $region8: #{tpu_custom_call.1} parent=1 // loop_exit
      _
    %727 = vsyncpa [#allocation3], 1
    %s728 = scalar_lea.sflag [#allocation3], 1
    %729 = vsyncpa %s728, 1
    %730 = vsyncpa [#allocation4], 1
    %s731 = scalar_lea.sflag [#allocation4], 1
    %732 = vsyncpa %s731, 1

</llo_original>
